<compile_context>
chip_gen: v7x
topology: tpu7x:2x2x1
jax: 0.10.0
libtpu: 0.0.40
codegen_flags: <defaults>
</compile_context>

<pallas_src>
import jax
import jax.numpy as jnp
from jax.experimental import pallas as pl
from jax.experimental.pallas import tpu as pltpu

IN_FEATURES = 41 * 11   # 451
HIDDEN = 128
OUT = 1
LEAKY_SLOPE = 0.01      # torch nn.LeakyReLU default


def _round_up(n, m):
    return ((n + m - 1) // m) * m


def _disc1_kernel(x_ref, w1_ref, b1_ref, w2_ref, b2_ref, o_ref):
    # fc1: cast the streamed f32 rows to bf16 on the VPU (hidden under the x
    # DMA), then (tb, 451)bf16 @ (451, 128)bf16 -> f32 accumulation on the MXU.
    x_bf16 = x_ref[...].astype(jnp.bfloat16)
    h = jnp.dot(x_bf16, w1_ref[...], preferred_element_type=jnp.float32)
    h = h + b1_ref[...]                        # (1, 128) broadcast, f32
    h = jnp.where(h > 0, h, LEAKY_SLOPE * h)   # LeakyReLU, f32 on the VPU
    # Dropout(0.5): identity in eval mode.
    # fc2: (tb, 128) @ (128, 1); MXU push is hidden under the x DMA.
    z = jnp.dot(h, w2_ref[...], preferred_element_type=jnp.float32)
    z = z + b2_ref[0, 0]                       # scalar bias from SMEM
    o_ref[...] = jax.nn.sigmoid(z)             # EUP-friendly sigmoid


def init_params(key):
    """Deterministic init mimicking torch.nn.Linear default (U[-1/sqrt(fan_in), +])."""
    k1, k2, k3, k4 = jax.random.split(key, 4)
    bound1 = 1.0 / jnp.sqrt(float(IN_FEATURES))
    bound2 = 1.0 / jnp.sqrt(float(HIDDEN))
    w1 = jax.random.uniform(k1, (IN_FEATURES, HIDDEN), jnp.float32, -bound1, bound1)
    b1 = jax.random.uniform(k2, (1, HIDDEN), jnp.float32, -bound1, bound1)
    w2 = jax.random.uniform(k3, (HIDDEN, OUT), jnp.float32, -bound2, bound2)
    b2 = jax.random.uniform(k4, (1, OUT), jnp.float32, -bound2, bound2)
    return w1, b1, w2, b2


def discriminator1_forward(x, params, *, block_b=4096):
    w1, b1, w2, b2 = params
    x2 = x.reshape(-1, IN_FEATURES)            # torch .view(-1, 451)
    x2 = x2.astype(jnp.float32)                # no-op for f32 inputs (no extra HBM pass)
    B = x2.shape[0]

    # Weights are tiny: bf16 for the fc1 MXU operand, f32 for everything else.
    w1 = w1.astype(jnp.bfloat16)
    b1 = jnp.asarray(b1, jnp.float32).reshape(1, HIDDEN)
    w2 = jnp.asarray(w2, jnp.float32).reshape(HIDDEN, OUT)
    b2 = jnp.asarray(b2, jnp.float32).reshape(1, 1)

    # Tile: multiple of 8 sublanes, at most ceil(B/2) so there are >=2 grid
    # steps (v7x megacore), capped at block_b so double-buffered f32 x blocks
    # plus lane-padded (tb,1) out blocks fit the 48 MiB scoped-VMEM budget.
    tb = min(block_b, _round_up(pl.cdiv(B, 2), 8))
    grid = (pl.cdiv(B, tb),)                   # last block may be partial

    cost = pl.CostEstimate(
        flops=2 * B * IN_FEATURES * HIDDEN + 2 * B * HIDDEN,
        transcendentals=B,  # exp in the sigmoid
        bytes_accessed=(B * IN_FEATURES * 4             # x (f32, streamed once)
                        + IN_FEATURES * HIDDEN * 2      # w1 (bf16)
                        + HIDDEN * 4 + HIDDEN * OUT * 4 + 4   # b1, w2, b2 (f32)
                        + B * OUT * 4),                 # output (f32)
    )

    out = pl.pallas_call(
        _disc1_kernel,
        out_shape=jax.ShapeDtypeStruct((B, OUT), jnp.float32),
        grid=grid,
        in_specs=[
            pl.BlockSpec((tb, IN_FEATURES), lambda i: (i, 0)),      # x: streamed f32
            pl.BlockSpec((IN_FEATURES, HIDDEN), lambda i: (0, 0)),  # w1: resident
            pl.BlockSpec((1, HIDDEN), lambda i: (0, 0)),            # b1: resident
            pl.BlockSpec((HIDDEN, OUT), lambda i: (0, 0)),          # w2: resident
            pl.BlockSpec(memory_space=pltpu.MemorySpace.SMEM),      # b2: SMEM scalar
        ],
        out_specs=pl.BlockSpec((tb, OUT), lambda i: (i, 0)),
        compiler_params=pltpu.CompilerParams(
            dimension_semantics=("parallel",),
            vmem_limit_bytes=48 * 1024 * 1024,
        ),
        cost_estimate=cost,
    )(x2, w1, b1, w2, b2)

    return out


def reference_forward(x, params):
    """Pure-JAX reference mirroring the kernel's precision (bf16 fc1 operands)."""
    w1, b1, w2, b2 = params
    x2 = x.reshape(-1, IN_FEATURES)
    h = jnp.dot(x2.astype(jnp.bfloat16), w1.astype(jnp.bfloat16),
                preferred_element_type=jnp.float32) + b1.reshape(1, HIDDEN)
    h = jnp.where(h > 0, h, LEAKY_SLOPE * h)
    z = h @ w2.reshape(HIDDEN, OUT) + jnp.asarray(b2, jnp.float32).reshape(1, 1)
    return jax.nn.sigmoid(z)


if __name__ == "__main__":
    key = jax.random.PRNGKey(0)
    k_params, k_x = jax.random.split(key)
    params = init_params(k_params)

    # Small batches of "flag" samples, shape (B, 41, 11) -> flattened to (B, 451).
    # B=13 exercises the partial-last-block (masked OOB store) path.
    for B in (8, 13):
        x = jax.random.normal(jax.random.fold_in(k_x, B), (B, 41, 11),
                              dtype=jnp.float32)
        out = jax.block_until_ready(discriminator1_forward(x, params))
        ref = reference_forward(x, params)
        assert out.shape == (B, OUT), out.shape
        err = float(jnp.max(jnp.abs(out - ref)))
        assert jnp.allclose(out, ref, atol=2e-3, rtol=2e-3), err
    print("KERNEL_OK")
</pallas_src>

<mosaic_0001>
module attributes {stable_mosaic.version = 11 : i64} {
  func.func @_disc1_kernel(%arg0: i32, %arg1: memref<8x451xf32, #tpu.memory_space<vmem>>, %arg2: memref<451x128xbf16, #tpu.memory_space<vmem>>, %arg3: memref<1x128xf32, #tpu.memory_space<vmem>>, %arg4: memref<128x1xf32, #tpu.memory_space<vmem>>, %arg5: memref<1x1xf32, #tpu.memory_space<smem>>, %arg6: memref<8x1xf32, #tpu.memory_space<vmem>>) attributes {dimension_semantics = [#tpu.dimension_semantics<parallel>], iteration_bounds = array<i64: 1>, scalar_prefetch = 0 : i64, scratch_operands = 0 : i64, tpu.core_type = #tpu.core_type<tc>, window_params = [{transform_indices = @transform_0, window_bounds = array<i64: 8, 451>}, {pipeline_mode = #tpu.pipeline_mode<synchronous>, transform_indices = @transform_1, window_bounds = array<i64: 451, 128>}, {pipeline_mode = #tpu.pipeline_mode<synchronous>, transform_indices = @transform_2, window_bounds = array<i64: 1, 128>}, {pipeline_mode = #tpu.pipeline_mode<synchronous>, transform_indices = @transform_3, window_bounds = array<i64: 128, 1>}, {transform_indices = @transform_4, window_bounds = array<i64: 1, 1>}, {transform_indices = @transform_5, window_bounds = array<i64: 8, 1>}]} {
    %c0 = arith.constant 0 : index
    %c0_0 = arith.constant 0 : index
    %0 = vector.load %arg1[%c0, %c0_0] : memref<8x451xf32, #tpu.memory_space<vmem>>, vector<8x451xf32>
    %1 = arith.truncf %0 : vector<8x451xf32> to vector<8x451xbf16>
    %c0_1 = arith.constant 0 : index
    %c0_2 = arith.constant 0 : index
    %2 = vector.load %arg2[%c0_1, %c0_2] : memref<451x128xbf16, #tpu.memory_space<vmem>>, vector<451x128xbf16>
    %cst = arith.constant dense<0.000000e+00> : vector<8x128xf32>
    %3 = tpu.matmul %1, %2, %cst {dimension_numbers = #tpu.dot_dimension_numbers<[1], [0], [0], [1], [0, 0, 1, 1], [], []>} : vector<8x451xbf16>, vector<451x128xbf16>, vector<8x128xf32> -> vector<8x128xf32>
    %c0_3 = arith.constant 0 : index
    %c0_4 = arith.constant 0 : index
    %4 = vector.load %arg3[%c0_3, %c0_4] : memref<1x128xf32, #tpu.memory_space<vmem>>, vector<1x128xf32>
    %5 = vector.broadcast %4 : vector<1x128xf32> to vector<8x128xf32>
    %6 = arith.addf %3, %5 : vector<8x128xf32>
    %cst_5 = arith.constant 0.000000e+00 : f32
    %7 = vector.broadcast %cst_5 : f32 to vector<8x128xf32>
    %8 = arith.cmpf ogt, %6, %7 : vector<8x128xf32>
    %cst_6 = arith.constant 0.00999999977 : f32
    %9 = vector.broadcast %cst_6 : f32 to vector<8x128xf32>
    %10 = arith.mulf %9, %6 : vector<8x128xf32>
    %11 = arith.select %8, %6, %10 : vector<8x128xi1>, vector<8x128xf32>
    %c0_7 = arith.constant 0 : index
    %c0_8 = arith.constant 0 : index
    %12 = vector.load %arg4[%c0_7, %c0_8] : memref<128x1xf32, #tpu.memory_space<vmem>>, vector<128x1xf32>
    %cst_9 = arith.constant dense<0.000000e+00> : vector<8x1xf32>
    %13 = tpu.matmul %11, %12, %cst_9 {dimension_numbers = #tpu.dot_dimension_numbers<[1], [0], [0], [1], [0, 0, 1, 1], [], []>} : vector<8x128xf32>, vector<128x1xf32>, vector<8x1xf32> -> vector<8x1xf32>
    %c0_10 = arith.constant 0 : index
    %c0_11 = arith.constant 0 : index
    %14 = memref.load %arg5[%c0_10, %c0_11] : memref<1x1xf32, #tpu.memory_space<smem>>
    %15 = vector.broadcast %14 : f32 to vector<8x1xf32>
    %16 = arith.addf %13, %15 : vector<8x1xf32>
    %17 = arith.negf %16 : vector<8x1xf32>
    %18 = math.exp %17 : vector<8x1xf32>
    %cst_12 = arith.constant 1.000000e+00 : f32
    %19 = vector.broadcast %cst_12 : f32 to vector<8x1xf32>
    %20 = arith.addf %19, %18 : vector<8x1xf32>
    %21 = arith.divf %19, %20 : vector<8x1xf32>
    %c0_13 = arith.constant 0 : index
    %c0_14 = arith.constant 0 : index
    %22 = vector.load %arg6[%c0_13, %c0_14] : memref<8x1xf32, #tpu.memory_space<vmem>>, vector<8x1xf32>
    tpu.vector_store %arg6[%c0_13, %c0_14], %21 {strides = array<i32>} : memref<8x1xf32, #tpu.memory_space<vmem>>, vector<8x1xf32>,
    return
  }
  func.func @transform_0(%arg0: i32) -> (i32, i32) {
    %c0_i32 = arith.constant 0 : i32
    %c0_i32_0 = arith.constant 0 : i32
    return %arg0, %c0_i32 : i32, i32
  }
  func.func @transform_1(%arg0: i32) -> (i32, i32) {
    %c0_i32 = arith.constant 0 : i32
    %c0_i32_0 = arith.constant 0 : i32
    %c0_i32_1 = arith.constant 0 : i32
    return %c0_i32, %c0_i32_0 : i32, i32
  }
  func.func @transform_2(%arg0: i32) -> (i32, i32) {
    %c0_i32 = arith.constant 0 : i32
    %c0_i32_0 = arith.constant 0 : i32
    %c0_i32_1 = arith.constant 0 : i32
    return %c0_i32, %c0_i32_0 : i32, i32
  }
  func.func @transform_3(%arg0: i32) -> (i32, i32) {
    %c0_i32 = arith.constant 0 : i32
    %c0_i32_0 = arith.constant 0 : i32
    %c0_i32_1 = arith.constant 0 : i32
    return %c0_i32, %c0_i32_0 : i32, i32
  }
  func.func @transform_4(%arg0: i32) -> (i32, i32) {
    %c0_i32 = arith.constant 0 : i32
    %c0_i32_0 = arith.constant 0 : i32
    %c0_i32_1 = arith.constant 0 : i32
    return %c0_i32, %c0_i32_0 : i32, i32
  }
  func.func @transform_5(%arg0: i32) -> (i32, i32) {
    %c0_i32 = arith.constant 0 : i32
    %c0_i32_0 = arith.constant 0 : i32
    return %arg0, %c0_i32 : i32, i32
  }
}

</mosaic_0001>

<llo_original>
// kernel: tpu_custom_call.1
$region0: #{tpu_custom_call.1}
  #allocation0 [shape = 'u32[]', space=smem, size = 0x4, offset = 0x4, fixed_abs, tag = 'smem constant byte address 0x4 - core index']
  #allocation1 [shape = 'u32[144,128]{1,0:T(1,128)}', space=vmem, size = 0x12000, scoped, tag = 'internal scratch']
  #allocation2 [shape = 'f32[1,1]{1,0:T(1,128)S(6)}', space=smem, size = 0x200, scoped, tag = 'scoped memory for tpu_custom_call.1']
  %s0 = inlined_call_operand.vmem [shape: f32[8,451], index: 0, kind: input, shape index: {}]
  %s1 = inlined_call_operand.hbm [shape: bf16[451,128], index: 1, kind: input, shape index: {}]
  %s2 = inlined_call_operand.vmem [shape: f32[1,128], index: 2, kind: input, shape index: {}]
  %s3 = inlined_call_operand.vmem [shape: f32[128,1], index: 3, kind: input, shape index: {}]
  %s4 = inlined_call_operand.<no memory space> [shape: f32[1,1], index: 4, kind: input, shape index: {}]
  %s5 = inlined_call_operand.vmem [shape: f32[8,1], index: 5, kind: output, shape index: {}]
  %s6 = sld [smem:[#allocation0]]
  $region34: #{tpu_custom_call.1} parent=0
    _
  %s8 = ssub.s32 1, %s6
  %s9 = scalar_select 0, %s8, %s6
  %10 = sst [smem:[#allocation2]] %s4
  $region1: #{tpu_custom_call.1} parent=0
    #allocation3 [shape = 'u8[116736]{0}', space=vmem, size = 0x1c800, scoped, tag = 'input window, operand 1, single buffered']
    #allocation4 [shape = 's32[1]{0}', space=sflag, size = 0x4, scoped, tag = 'scoped memory for tpu_custom_call.1']
    %11 = vsyncpa [#allocation4], 0
    // Predicated region
    $region2: #{tpu_custom_call.1} parent=1 // pred_check
      _
    $region3: #{tpu_custom_call.1} parent=1 // pred_check_branch
      %13 = sbr.rel (0) target = $region5
    $region4: #{tpu_custom_call.1} parent=1 // pred_region
      _
    $region5: #{tpu_custom_call.1} parent=1 // pred_fallthru
      _
    // Predicated region
    $region6: #{tpu_custom_call.1} parent=1 // pred_check
      _
    $region7: #{tpu_custom_call.1} parent=1 // pred_check_branch
      %15 = sbr.rel (0) target = $region9
    $region8: #{tpu_custom_call.1} parent=1 // pred_region
      %s17 = ssub.s32 3648, 3648
      %18 = vsyncadd [#allocation4], %s17
      %s19 = sshll.u32 [#allocation3], 4
      %s20 = int_to_ptr.vmem [resolvable:$true] %s19
      %25 = dma.hbm_to_vmem [thread:$0]  %s1, 3648, %s20, [#allocation4], 64, 64, 4
    $region9: #{tpu_custom_call.1} parent=1 // pred_fallthru
      _
    // Predicated region
    $region10: #{tpu_custom_call.1} parent=1 // pred_check
      _
    $region11: #{tpu_custom_call.1} parent=1 // pred_check_branch
      %27 = sbr.rel (0) target = $region13
    $region12: #{tpu_custom_call.1} parent=1 // pred_region
      _
    $region13: #{tpu_custom_call.1} parent=1 // pred_fallthru
      _
    // Predicated region
    $region14: #{tpu_custom_call.1} parent=1 // pred_check
      _
    $region15: #{tpu_custom_call.1} parent=1 // pred_check_branch
      %29 = sbr.rel (0) target = $region17
    $region16: #{tpu_custom_call.1} parent=1 // pred_region
      _
    $region17: #{tpu_custom_call.1} parent=1 // pred_fallthru
      _
    // Predicated region
    $region18: #{tpu_custom_call.1} parent=1 // pred_check
      _
    $region19: #{tpu_custom_call.1} parent=1 // pred_check_branch
      %31 = sbr.rel (0) target = $region21
    $region20: #{tpu_custom_call.1} parent=1 // pred_region
      _
    $region21: #{tpu_custom_call.1} parent=1 // pred_fallthru
      _
    // Predicated region
    $region22: #{tpu_custom_call.1} parent=1 // pred_check
      _
    $region23: #{tpu_custom_call.1} parent=1 // pred_check_branch
      %33 = sbr.rel (0) target = $region25
    $region24: #{tpu_custom_call.1} parent=1 // pred_region
      %34 = dma.done [#allocation4], 3648
    $region25: #{tpu_custom_call.1} parent=1 // pred_fallthru
      _
    %v36 = vld [vmem:[%s0] sm:$0xff]
    %v37 = vld [vmem:[%s0 + $0x8] sm:$0xff]
    %v38 = vld [vmem:[%s0 + $0x10] sm:$0xff]
    %v39 = vld [vmem:[%s0 + $0x18] sm:$0xff]
    %v40 = vpack.c.bf16 %v36, %v36
    %v41 = vpack.c.bf16 %v37, %v37
    %v42 = vpack.c.bf16 %v38, %v38
    %v43 = vpack.c.bf16 %v39, %v39
    %v44 = vld [vmem:[#allocation3] sm:$0xf]
    %v45 = vld [vmem:[#allocation3 + $0x4] sm:$0xf]
    %v46 = vld [vmem:[#allocation3 + $0x8] sm:$0xf]
    %v47 = vld [vmem:[#allocation3 + $0xc] sm:$0xf]
    %v48 = vld [vmem:[#allocation3 + $0x10] sm:$0xf]
    %v49 = vld [vmem:[#allocation3 + $0x14] sm:$0xf]
    %v50 = vld [vmem:[#allocation3 + $0x18] sm:$0xf]
    %v51 = vld [vmem:[#allocation3 + $0x1c] sm:$0xf]
    %v52 = vld [vmem:[#allocation3 + $0x20] sm:$0xf]
    %v53 = vld [vmem:[#allocation3 + $0x24] sm:$0xf]
    %v54 = vld [vmem:[#allocation3 + $0x28] sm:$0xf]
    %v55 = vld [vmem:[#allocation3 + $0x2c] sm:$0xf]
    %v56 = vld [vmem:[#allocation3 + $0x30] sm:$0xf]
    %v57 = vld [vmem:[#allocation3 + $0x34] sm:$0xf]
    %v58 = vld [vmem:[#allocation3 + $0x38] sm:$0xf]
    %v59 = vld [vmem:[#allocation3 + $0x3c] sm:$0xf]
    %v60 = vld [vmem:[#allocation3 + $0x40] sm:$0xf]
    %v61 = vld [vmem:[#allocation3 + $0x44] sm:$0xf]
    %v62 = vld [vmem:[#allocation3 + $0x48] sm:$0xf]
    %v63 = vld [vmem:[#allocation3 + $0x4c] sm:$0xf]
    %v64 = vld [vmem:[#allocation3 + $0x50] sm:$0xf]
    %v65 = vld [vmem:[#allocation3 + $0x54] sm:$0xf]
    %v66 = vld [vmem:[#allocation3 + $0x58] sm:$0xf]
    %v67 = vld [vmem:[#allocation3 + $0x5c] sm:$0xf]
    %v68 = vld [vmem:[#allocation3 + $0x60] sm:$0xf]
    %v69 = vld [vmem:[#allocation3 + $0x64] sm:$0xf]
    %v70 = vld [vmem:[#allocation3 + $0x68] sm:$0xf]
    %v71 = vld [vmem:[#allocation3 + $0x6c] sm:$0xf]
    %v72 = vld [vmem:[#allocation3 + $0x70] sm:$0xf]
    %v73 = vld [vmem:[#allocation3 + $0x74] sm:$0xf]
    %v74 = vld [vmem:[#allocation3 + $0x78] sm:$0xf]
    %v75 = vld [vmem:[#allocation3 + $0x7c] sm:$0xf]
    %v76 = vld [vmem:[#allocation3 + $0x80] sm:$0xf]
    %v77 = vld [vmem:[#allocation3 + $0x84] sm:$0xf]
    %v78 = vld [vmem:[#allocation3 + $0x88] sm:$0xf]
    %v79 = vld [vmem:[#allocation3 + $0x8c] sm:$0xf]
    %v80 = vld [vmem:[#allocation3 + $0x90] sm:$0xf]
    %v81 = vld [vmem:[#allocation3 + $0x94] sm:$0xf]
    %v82 = vld [vmem:[#allocation3 + $0x98] sm:$0xf]
    %v83 = vld [vmem:[#allocation3 + $0x9c] sm:$0xf]
    %v84 = vld [vmem:[#allocation3 + $0xa0] sm:$0xf]
    %v85 = vld [vmem:[#allocation3 + $0xa4] sm:$0xf]
    %v86 = vld [vmem:[#allocation3 + $0xa8] sm:$0xf]
    %v87 = vld [vmem:[#allocation3 + $0xac] sm:$0xf]
    %v88 = vld [vmem:[#allocation3 + $0xb0] sm:$0xf]
    %v89 = vld [vmem:[#allocation3 + $0xb4] sm:$0xf]
    %v90 = vld [vmem:[#allocation3 + $0xb8] sm:$0xf]
    %v91 = vld [vmem:[#allocation3 + $0xbc] sm:$0xf]
    %v92 = vld [vmem:[#allocation3 + $0xc0] sm:$0xf]
    %v93 = vld [vmem:[#allocation3 + $0xc4] sm:$0xf]
    %v94 = vld [vmem:[#allocation3 + $0xc8] sm:$0xf]
    %v95 = vld [vmem:[#allocation3 + $0xcc] sm:$0xf]
    %v96 = vld [vmem:[#allocation3 + $0xd0] sm:$0xf]
    %v97 = vld [vmem:[#allocation3 + $0xd4] sm:$0xf]
    %v98 = vld [vmem:[#allocation3 + $0xd8] sm:$0xf]
    %v99 = vld [vmem:[#allocation3 + $0xdc] sm:$0xf]
    %v100 = vld [vmem:[#allocation3 + $0xe0] sm:$0x3]
    %v101 = vld [vmem:[%s2] sm:$0x1]
    %v103 = vlaneseq
    %v104 = vshrl.u32 %v103, 7
    %v105 = vsub.s32 0, %v104
    %v106 = vrot.slane %v101, %v105
    %v165 = vunpack.c.l.b16 %v44
    %v166 = vunpack.c.l.b16 %v45
    %v167 = vunpack.c.l.b16 %v46
    %v168 = vunpack.c.l.b16 %v47
    %v169 = vunpack.c.l.b16 %v48
    %v170 = vunpack.c.l.b16 %v49
    %v171 = vunpack.c.l.b16 %v50
    %v172 = vunpack.c.l.b16 %v51
    %v173 = vunpack.c.l.b16 %v52
    %v174 = vunpack.c.l.b16 %v53
    %v175 = vunpack.c.l.b16 %v54
    %v176 = vunpack.c.l.b16 %v55
    %v177 = vunpack.c.l.b16 %v56
    %v178 = vunpack.c.l.b16 %v57
    %v179 = vunpack.c.l.b16 %v58
    %v180 = vunpack.c.l.b16 %v59
    %v181 = vunpack.c.l.b16 %v60
    %v182 = vunpack.c.l.b16 %v61
    %v183 = vunpack.c.l.b16 %v62
    %v184 = vunpack.c.l.b16 %v63
    %v185 = vunpack.c.l.b16 %v64
    %v186 = vunpack.c.l.b16 %v65
    %v187 = vunpack.c.l.b16 %v66
    %v188 = vunpack.c.l.b16 %v67
    %v189 = vunpack.c.l.b16 %v68
    %v190 = vunpack.c.l.b16 %v69
    %v191 = vunpack.c.l.b16 %v70
    %v192 = vunpack.c.l.b16 %v71
    %v193 = vunpack.c.l.b16 %v72
    %v194 = vunpack.c.l.b16 %v73
    %v195 = vunpack.c.l.b16 %v74
    %v196 = vunpack.c.l.b16 %v75
    %v197 = vunpack.c.l.b16 %v76
    %v198 = vunpack.c.l.b16 %v77
    %v199 = vunpack.c.l.b16 %v78
    %v200 = vunpack.c.l.b16 %v79
    %v201 = vunpack.c.l.b16 %v80
    %v202 = vunpack.c.l.b16 %v81
    %v203 = vunpack.c.l.b16 %v82
    %v204 = vunpack.c.l.b16 %v83
    %v205 = vunpack.c.l.b16 %v84
    %v206 = vunpack.c.l.b16 %v85
    %v207 = vunpack.c.l.b16 %v86
    %v208 = vunpack.c.l.b16 %v87
    %v209 = vunpack.c.l.b16 %v88
    %v210 = vunpack.c.l.b16 %v89
    %v211 = vunpack.c.l.b16 %v90
    %v212 = vunpack.c.l.b16 %v91
    %v213 = vunpack.c.l.b16 %v92
    %v214 = vunpack.c.l.b16 %v93
    %v215 = vunpack.c.l.b16 %v94
    %v216 = vunpack.c.l.b16 %v95
    %v217 = vunpack.c.l.b16 %v96
    %v218 = vunpack.c.l.b16 %v97
    %v219 = vunpack.c.l.b16 %v98
    %v220 = vunpack.c.l.b16 %v99
    %v221 = vunpack.c.l.b16 %v100
    %v222 = vpack.c.b16 %v166, %v165
    %v223 = vpack.c.b16 %v168, %v167
    %v224 = vpack.c.b16 %v170, %v169
    %v225 = vpack.c.b16 %v172, %v171
    %v226 = vpack.c.b16 %v174, %v173
    %v227 = vpack.c.b16 %v176, %v175
    %v228 = vpack.c.b16 %v178, %v177
    %v229 = vpack.c.b16 %v180, %v179
    %v230 = vpack.c.b16 %v182, %v181
    %v231 = vpack.c.b16 %v184, %v183
    %v232 = vpack.c.b16 %v186, %v185
    %v233 = vpack.c.b16 %v188, %v187
    %v234 = vpack.c.b16 %v190, %v189
    %v235 = vpack.c.b16 %v192, %v191
    %v236 = vpack.c.b16 %v194, %v193
    %v237 = vpack.c.b16 %v196, %v195
    %v238 = vpack.c.b16 %v198, %v197
    %v239 = vpack.c.b16 %v200, %v199
    %v240 = vpack.c.b16 %v202, %v201
    %v241 = vpack.c.b16 %v204, %v203
    %v242 = vpack.c.b16 %v206, %v205
    %v243 = vpack.c.b16 %v208, %v207
    %v244 = vpack.c.b16 %v210, %v209
    %v245 = vpack.c.b16 %v212, %v211
    %v246 = vpack.c.b16 %v214, %v213
    %v247 = vpack.c.b16 %v216, %v215
    %v248 = vpack.c.b16 %v218, %v217
    %v249 = vpack.c.b16 %v220, %v219
    %v250 = vpack.c.b16 %v221, %v221
    %vm279 = vcmask 547840
    %v281 = vsel %vm279, %v43, 0
    %vm283 = vcmask 1040384
    %vm284 = vcmask 1041408
    %v285 = vsel %vm283, 4294967295, 65535
    %v286 = vsel %vm284, %v285, 0
    %v288 = vand.u32 %v250, %v286
    %290 = vmatprep.subr.bf16.mxu0 0
    %291 = vmatpush1.bf16.msra.mxu0 %v222
    %292 = vmatprep.subr.bf16.mxu0 0
    %293 = vmatpush1.bf16.msra.mxu0 %v223
    %294 = vmatprep.subr.bf16.mxu0 0
    %295 = vmatpush1.bf16.msra.mxu0 %v224
    %296 = vmatprep.subr.bf16.mxu0 0
    %297 = vmatpush1.bf16.msra.mxu0 %v225
    %298 = vmatprep.subr.bf16.mxu0 0
    %299 = vmatpush1.bf16.msra.mxu0 %v226
    %300 = vmatprep.subr.bf16.mxu0 0
    %301 = vmatpush1.bf16.msra.mxu0 %v227
    %302 = vmatprep.subr.bf16.mxu0 0
    %303 = vmatpush1.bf16.msra.mxu0 %v228
    %304 = vmatprep.subr.bf16.mxu0 0
    %305 = vmatpush1.bf16.msra.mxu0 %v229
    %306 = vmatprep.subr.bf16.mxu0 0
    %307 = vmatpush1.bf16.msra.mxu0 %v230
    %308 = vmatprep.subr.bf16.mxu0 0
    %309 = vmatpush1.bf16.msra.mxu0 %v231
    %310 = vmatprep.subr.bf16.mxu0 0
    %311 = vmatpush1.bf16.msra.mxu0 %v232
    %312 = vmatprep.subr.bf16.mxu0 0
    %313 = vmatpush1.bf16.msra.mxu0 %v233
    %314 = vmatprep.subr.bf16.mxu0 0
    %315 = vmatpush1.bf16.msra.mxu0 %v234
    %316 = vmatprep.subr.bf16.mxu0 0
    %317 = vmatpush1.bf16.msra.mxu0 %v235
    %318 = vmatprep.subr.bf16.mxu0 0
    %319 = vmatpush1.bf16.msra.mxu0 %v236
    %320 = vmatprep.subr.bf16.mxu0 0
    %321 = vmatpush1.bf16.msra.mxu0 %v237
    %322 = vmatprep.mubr.bf16.mxu0 %v41
    %323 = vmatmul.mubr.bf16.gmra.mrb[0].mxu0 %v40
    %v324 = vpop.f32.mrb[0].mxu0
    %v325 = vadd.f32 %v106, %v324
    %v326 = vpop.f32.mrb[0].mxu0
    %v327 = vpop.f32.mrb[0].mxu0
    %v328 = vpop.f32.mrb[0].mxu0
    %329 = vdwg.mxu0
    %330 = vmatprep.subr.bf16.mxu0 0
    %331 = vmatpush1.bf16.msra.mxu0 %v238
    %332 = vmatprep.subr.bf16.mxu0 0
    %333 = vmatpush1.bf16.msra.mxu0 %v239
    %334 = vmatprep.subr.bf16.mxu0 0
    %335 = vmatpush1.bf16.msra.mxu0 %v240
    %336 = vmatprep.subr.bf16.mxu0 0
    %337 = vmatpush1.bf16.msra.mxu0 %v241
    %338 = vmatprep.subr.bf16.mxu0 0
    %339 = vmatpush1.bf16.msra.mxu0 %v242
    %340 = vmatprep.subr.bf16.mxu0 0
    %341 = vmatpush1.bf16.msra.mxu0 %v243
    %342 = vmatprep.subr.bf16.mxu0 0
    %343 = vmatpush1.bf16.msra.mxu0 %v244
    %344 = vmatprep.subr.bf16.mxu0 0
    %345 = vmatpush1.bf16.msra.mxu0 %v245
    %346 = vmatprep.subr.bf16.mxu0 0
    %347 = vmatpush1.bf16.msra.mxu0 %v246
    %348 = vmatprep.subr.bf16.mxu0 0
    %349 = vmatpush1.bf16.msra.mxu0 %v247
    %350 = vmatprep.subr.bf16.mxu0 0
    %351 = vmatpush1.bf16.msra.mxu0 %v248
    %352 = vmatprep.subr.bf16.mxu0 0
    %353 = vmatpush1.bf16.msra.mxu0 %v249
    %354 = vmatprep.subr.bf16.mxu0 0
    %355 = vmatpush1.bf16.msra.mxu0 %v288
    %356 = vmatprep.subr.bf16.mxu0 0
    %357 = vmatpush1.bf16.msra.mxu0 0
    %358 = vmatprep.subr.bf16.mxu0 0
    %359 = vmatpush1.bf16.msra.mxu0 0
    %360 = vmatprep.subr.bf16.mxu0 0
    %361 = vmatpush1.bf16.msra.mxu0 0
    %362 = vmatprep.mubr.bf16.mxu0 %v281
    %363 = vmatmul.mubr.bf16.gmra.mrb[0].mxu0 %v42
    %v364 = vpop.f32.mrb[0].mxu0
    %v365 = vadd.f32 %v325, %v364
    %v366 = vpop.f32.mrb[0].mxu0
    %v367 = vpop.f32.mrb[0].mxu0
    %v368 = vpop.f32.mrb[0].mxu0
    %369 = vdwg.mxu0
    %vm370 = vcmp.gt.f32.partialorder %v365, 0.0
    %v371 = vmul.f32 %v365, 0.01
    %v372 = vsel %vm370, %v365, %v371
    %v373 = vld [vmem:[%s3] sm:$0xff]
    %v374 = vld [vmem:[%s3 + $0x8] sm:$0xff]
    %v375 = vld [vmem:[%s3 + $0x10] sm:$0xff]
    %v376 = vld [vmem:[%s3 + $0x18] sm:$0xff]
    %v377 = vld [vmem:[%s3 + $0x20] sm:$0xff]
    %v378 = vld [vmem:[%s3 + $0x28] sm:$0xff]
    %v379 = vld [vmem:[%s3 + $0x30] sm:$0xff]
    %v380 = vld [vmem:[%s3 + $0x38] sm:$0xff]
    %v381 = vld [vmem:[%s3 + $0x40] sm:$0xff]
    %v382 = vld [vmem:[%s3 + $0x48] sm:$0xff]
    %v383 = vld [vmem:[%s3 + $0x50] sm:$0xff]
    %v384 = vld [vmem:[%s3 + $0x58] sm:$0xff]
    %v385 = vld [vmem:[%s3 + $0x60] sm:$0xff]
    %v386 = vld [vmem:[%s3 + $0x68] sm:$0xff]
    %v387 = vld [vmem:[%s3 + $0x70] sm:$0xff]
    %v388 = vld [vmem:[%s3 + $0x78] sm:$0xff]
    %s389 = sld [smem:[#allocation2]]
    %v390 = vstv %s389
    %391 = vmatprep.subr.mxu0 0.0
    %392 = vmatpush1.msra.mxu0 %v373
    %393 = vmatprep.subr.mxu0 0.0
    %394 = vmatpush1.msra.mxu0 %v374
    %395 = vmatprep.subr.mxu0 0.0
    %396 = vmatpush1.msra.mxu0 %v375
    %397 = vmatprep.subr.mxu0 0.0
    %398 = vmatpush1.msra.mxu0 %v376
    %399 = vmatprep.subr.mxu0 0.0
    %400 = vmatpush1.msra.mxu0 %v377
    %401 = vmatprep.subr.mxu0 0.0
    %402 = vmatpush1.msra.mxu0 %v378
    %403 = vmatprep.subr.mxu0 0.0
    %404 = vmatpush1.msra.mxu0 %v379
    %405 = vmatprep.subr.mxu0 0.0
    %406 = vmatpush1.msra.mxu0 %v380
    %407 = vmatprep.subr.mxu0 0.0
    %408 = vmatpush1.msra.mxu0 %v381
    %409 = vmatprep.subr.mxu0 0.0
    %410 = vmatpush1.msra.mxu0 %v382
    %411 = vmatprep.subr.mxu0 0.0
    %412 = vmatpush1.msra.mxu0 %v383
    %413 = vmatprep.subr.mxu0 0.0
    %414 = vmatpush1.msra.mxu0 %v384
    %415 = vmatprep.subr.mxu0 0.0
    %416 = vmatpush1.msra.mxu0 %v385
    %417 = vmatprep.subr.mxu0 0.0
    %418 = vmatpush1.msra.mxu0 %v386
    %419 = vmatprep.subr.mxu0 0.0
    %420 = vmatpush1.msra.mxu0 %v387
    %421 = vmatprep.subr.mxu0 0.0
    %422 = vmatpush1.msra.mxu0 %v388
    %423 = vmatprep.subr.mxu0 0.0
    %424 = vmatpush1.msra.mxu0 0.0
    %425 = vmatprep.subr.mxu0 0.0
    %426 = vmatpush1.msra.mxu0 0.0
    %427 = vmatprep.subr.mxu0 0.0
    %428 = vmatpush1.msra.mxu0 0.0
    %429 = vmatprep.subr.mxu0 0.0
    %430 = vmatpush1.msra.mxu0 0.0
    %431 = vmatprep.subr.mxu0 0.0
    %432 = vmatpush1.msra.mxu0 0.0
    %433 = vmatprep.subr.mxu0 0.0
    %434 = vmatpush1.msra.mxu0 0.0
    %435 = vmatprep.subr.mxu0 0.0
    %436 = vmatpush1.msra.mxu0 0.0
    %437 = vmatprep.subr.mxu0 0.0
    %438 = vmatpush1.msra.mxu0 0.0
    %439 = vmatprep.subr.mxu0 0.0
    %440 = vmatpush1.msra.mxu0 0.0
    %441 = vmatprep.subr.mxu0 0.0
    %442 = vmatpush1.msra.mxu0 0.0
    %443 = vmatprep.subr.mxu0 0.0
    %444 = vmatpush1.msra.mxu0 0.0
    %445 = vmatprep.subr.mxu0 0.0
    %446 = vmatpush1.msra.mxu0 0.0
    %447 = vmatprep.subr.mxu0 0.0
    %448 = vmatpush1.msra.mxu0 0.0
    %449 = vmatprep.subr.mxu0 0.0
    %450 = vmatpush1.msra.mxu0 0.0
    %451 = vmatprep.subr.mxu0 0.0
    %452 = vmatpush1.msra.mxu0 0.0
    %453 = vmatprep.subr.mxu0 0.0
    %454 = vmatpush1.msra.mxu0 0.0
    %455 = vmatprep.mubr.f32.mxu0 0.0
    %456 = vmatmul.mubr.f32.gmra.mrb[0].mxu0 %v372
    %v457 = vpop.f32.mrb[0].mxu0
    %v458 = vadd.f32 %v390, %v457
    %v459 = vpop.f32.mrb[0].mxu0
    %460 = vdwg.mxu0
    %v461 = vxor.u32 %v458, 2147483648
    %v462 = vmul.f32 %v461, 1.442695
    %v463 = vpow.pop %v462
    %v464 = vadd.f32 %v463, 1.0
    %v465 = vrcp.pop %v464
    %v466 = vmul.f32 1.0, %v465
    %vm467 = vcmask 7168
    %468 = vst.msk [vmem:[%s5] sm:$0xff] %vm467, %v466
    // Predicated region
    $region26: #{tpu_custom_call.1} parent=1 // pred_check
      _
    $region27: #{tpu_custom_call.1} parent=1 // pred_check_branch
      %470 = sbr.rel (0) target = $region29
    $region28: #{tpu_custom_call.1} parent=1 // pred_region
      _
    $region29: #{tpu_custom_call.1} parent=1 // pred_fallthru
      _
    // Predicated region
    $region30: #{tpu_custom_call.1} parent=1 // pred_check
      _
    $region31: #{tpu_custom_call.1} parent=1 // pred_check_branch
      %472 = sbr.rel (0) target = $region33
    $region32: #{tpu_custom_call.1} parent=1 // pred_region
      _
    $region33: #{tpu_custom_call.1} parent=1 // pred_fallthru
      _
    %473 = vsyncpa [#allocation4], 1

</llo_original>
